<compile_context>
chip_gen: v7x
topology: tpu7x:2x2x1
jax: 0.10.0
libtpu: 0.0.40
codegen_flags: <defaults>
</compile_context>

<pallas_src>
import math

import jax
import jax.numpy as jnp
from jax.experimental import pallas as pl
from jax.experimental.pallas import tpu as pltpu

_GELU_C = 2.0 * math.sqrt(2.0 / math.pi)


def _gelu_tanh(x):
    # PyTorch nn.GELU(approximate='tanh'):
    #   0.5*x*(1 + tanh(z)),  z = sqrt(2/pi)*(x + 0.044715*x^3)
    # Exact identity 0.5*(1+tanh(z)) == sigmoid(2z) drops the *0.5 and +1.0
    # VPU ops; the transcendental lands on the EUP slot (co-issues with MXU).
    return x * jax.nn.sigmoid(_GELU_C * x * (1.0 + 0.044715 * x * x))


def _mlp_kernel_full(x_ref, w1_ref, b1_ref, w2_ref, b2_ref, o_ref):
    # Full hidden dim resident: single pass, no accumulator scratch
    # (saves tm*C*4 bytes of VMEM and a (tm,C) f32 read+write per step).
    h = jnp.dot(x_ref[...], w1_ref[...], preferred_element_type=jnp.float32)
    h = _gelu_tanh(h + b1_ref[...])
    out = jnp.dot(h.astype(w2_ref.dtype), w2_ref[...],
                  preferred_element_type=jnp.float32)
    o_ref[...] = (out + b2_ref[...]).astype(o_ref.dtype)


def _mlp_kernel_tiled(x_ref, w1_ref, b1_ref, w2_ref, b2_ref, o_ref, acc_ref):
    # Hidden dim tiled: f32 accumulator resident across the H grid axis (P3).
    j = pl.program_id(1)

    @pl.when(j == 0)
    def _init():
        acc_ref[...] = jnp.zeros_like(acc_ref)

    h = jnp.dot(x_ref[...], w1_ref[...], preferred_element_type=jnp.float32)
    h = _gelu_tanh(h + b1_ref[...])
    acc_ref[...] += jnp.dot(h.astype(w2_ref.dtype), w2_ref[...],
                            preferred_element_type=jnp.float32)

    @pl.when(j == pl.num_programs(1) - 1)
    def _finalize():
        o_ref[...] = (acc_ref[...] + b2_ref[...]).astype(o_ref.dtype)


def _vmem_capacity_bytes():
    try:
        return int(pltpu.get_tpu_info().vmem_capacity_bytes)
    except Exception:
        return 64 << 20  # conservative (v7x-sized) fallback


def _round_down(v, m):
    return max(m, (v // m) * m)


def _pick_th(H, max_th):
    """Largest divisor of H that is a multiple of 256 (or 128) and <= max_th.

    th must divide H: a ragged last H block would read Pallas block padding
    (not guaranteed zero) for W1 columns / W2 rows and corrupt the output.
    256 alignment keeps the v6e/v7x 256-wide MXU fully fed.
    """
    for align in (256, 128):
        best = None
        d = align
        limit = min(max_th, H)
        while d <= limit:
            if H % d == 0:
                best = d
            d += align
        if best is not None:
            return best
    return H  # no legal tile -> keep H untiled (correctness-safe)


def mlp_forward(x, w1, b1, w2, b2, *, block_m=None, block_h=None,
                compute_dtype=jnp.bfloat16):
    """GPT-2 MLP forward: c_proj(GELU_tanh(c_fc(x))).

    x: (B, T, C); w1: (C, 4C) (= nn.Linear.weight.T); b1: (4C,) or (1, 4C);
    w2: (4C, C); b2: (C,) or (1, C).

    compute_dtype (default bfloat16) casts x/W1/W2 for the MXU on every TPU
    generation; biases, GELU and accumulation stay f32 and the output keeps
    x.dtype.  Pass compute_dtype=jnp.float32 (or None) for full-f32 math.
    """
    B, T, C = x.shape
    H = w1.shape[1]
    M = B * T
    out_dtype = x.dtype

    if compute_dtype is not None:
        x = x.astype(compute_dtype)
        w1 = w1.astype(compute_dtype)
        w2 = w2.astype(compute_dtype)
    b1 = b1.astype(jnp.float32).reshape(1, H)
    b2 = b2.astype(jnp.float32).reshape(1, C)

    x2d = x.reshape(M, C)
    in_isz = x2d.dtype.itemsize
    out_isz = jnp.dtype(out_dtype).itemsize
    w_isz = w1.dtype.itemsize
    sub = 16 if in_isz == 2 else 8

    cap = _vmem_capacity_bytes()
    w_bytes = (C * H + H * C) * w_isz

    # --- Full-H weight residency decision (generation-aware: ~57 MiB budget
    # on 128 MiB chips, ~29 MiB on v7x's 64 MiB).  Full residency removes the
    # (M/tm)x weight re-streaming that dominates HBM traffic when H is tiled.
    if block_h is not None:
        full_h = block_h >= H
    else:
        full_h = w_bytes <= int(0.45 * cap)

    if full_h:
        th, n_h = H, 1
    else:
        # Double-buffered W1+W2 blocks (4*C*th*itemsize) capped at ~40% VMEM.
        max_th = max(128, int(0.40 * cap) // max(1, 4 * C * w_isz))
        if block_h is not None:
            max_th = min(max_th, block_h)
        th = _pick_th(H, max_th)
        n_h = H // th if th < H else 1
        if n_h == 1:
            full_h = True

    # --- Row tile.  Tiled-H weight traffic is (M/tm)*2*C*H*itemsize, so use a
    # larger tm there to stay under the HBM roofline; keep >=2 grid steps for
    # DMA/compute overlap and megacore sharding.
    tm = block_m if block_m is not None else (512 if full_h else 1024)
    tm = min(tm, M)
    if M >= 2 * sub:
        if tm >= M:
            tm = M // 2
        tm = _round_down(tm, 256) if tm >= 256 else _round_down(tm, sub)
        tm = _round_down(tm, sub)
    else:
        tm = M

    def vmem_needed(tm_):
        fixed = 2 * tm_ * C * in_isz + 2 * tm_ * C * out_isz + C * 4
        if full_h:
            return fixed + w_bytes + H * 4
        return (fixed + 2 * (C * th * w_isz + th * 4 + th * C * w_isz)
                + tm_ * C * 4)

    # Shrink tm until the working set fits comfortably on this generation.
    while tm > sub and vmem_needed(tm) > int(0.75 * cap):
        tm = _round_down(tm // 2, sub)

    grid_m = pl.cdiv(M, tm)
    single = pl.Buffered(1)  # constant blocks: no 2x double-buffer VMEM cost

    if full_h:
        grid = (grid_m,)
        in_specs = [
            pl.BlockSpec((tm, C), lambda i: (i, 0)),                          # x
            pl.BlockSpec((C, H), lambda i: (0, 0), pipeline_mode=single),     # W1
            pl.BlockSpec((1, H), lambda i: (0, 0), pipeline_mode=single),     # b1
            pl.BlockSpec((H, C), lambda i: (0, 0), pipeline_mode=single),     # W2
            pl.BlockSpec((1, C), lambda i: (0, 0), pipeline_mode=single),     # b2
        ]
        out_spec = pl.BlockSpec((tm, C), lambda i: (i, 0))
        scratch = []
        kernel = _mlp_kernel_full
        dims = ("parallel",)
    else:
        grid = (grid_m, n_h)
        in_specs = [
            pl.BlockSpec((tm, C), lambda i, j: (i, 0)),                       # x
            pl.BlockSpec((C, th), lambda i, j: (0, j)),                       # W1
            pl.BlockSpec((1, th), lambda i, j: (0, j)),                       # b1
            pl.BlockSpec((th, C), lambda i, j: (j, 0)),                       # W2
            pl.BlockSpec((1, C), lambda i, j: (0, 0), pipeline_mode=single),  # b2
        ]
        out_spec = pl.BlockSpec((tm, C), lambda i, j: (i, 0))
        scratch = [pltpu.VMEM((tm, C), jnp.float32)]
        kernel = _mlp_kernel_tiled
        dims = ("parallel", "arbitrary")

    # VMEM limit derived from actual need, hard-capped at 80% of physical
    # capacity (v7x has only 64 MiB per TensorCore).
    vmem_limit = min(int(0.8 * cap),
                     max(16 << 20, int(1.25 * vmem_needed(tm)) + (2 << 20)))

    cost = pl.CostEstimate(
        flops=4 * M * C * H,
        transcendentals=M * H,
        bytes_accessed=(M * C * (in_isz + out_isz)
                        + (C * H + H * C) * w_isz + (H + C) * 4),
    )

    out2d = pl.pallas_call(
        kernel,
        out_shape=jax.ShapeDtypeStruct((M, C), out_dtype),
        grid_spec=pltpu.PrefetchScalarGridSpec(
            num_scalar_prefetch=0,
            grid=grid,
            in_specs=in_specs,
            out_specs=out_spec,
            scratch_shapes=scratch,
        ),
        compiler_params=pltpu.CompilerParams(
            dimension_semantics=dims,
            vmem_limit_bytes=vmem_limit,
        ),
        cost_estimate=cost,
    )(x2d, w1, b1, w2, b2)

    return out2d.reshape(B, T, C)


if __name__ == "__main__":
    # Small GPT-2-style config, lane-dense output: n_embd=128 -> hidden=512.
    B, T, C = 4, 32, 128
    H = 4 * C

    key = jax.random.PRNGKey(0)
    kx, k1, k2 = jax.random.split(key, 3)

    x = jax.random.normal(kx, (B, T, C), dtype=jnp.float32)
    # nn.Linear weights stored transposed: (in, out); GPT-2-style std=0.02 init
    w1 = 0.02 * jax.random.normal(k1, (C, H), dtype=jnp.float32)
    b1 = jnp.zeros((1, H), dtype=jnp.float32)
    w2 = 0.02 * jax.random.normal(k2, (H, C), dtype=jnp.float32)
    b2 = jnp.zeros((1, C), dtype=jnp.float32)

    # Pure-JAX f32 reference (tanh GELU, exactly as PyTorch formulates it).
    ref = jnp.dot(x, w1) + b1
    ref = 0.5 * ref * (1.0 + jnp.tanh(math.sqrt(2.0 / math.pi)
                                      * (ref + 0.044715 * ref ** 3)))
    ref = jnp.dot(ref, w2) + b2

    # 1) f32 math, H tiled into 2 blocks -> exercises accumulate/finalize path.
    out = mlp_forward(x, w1, b1, w2, b2, block_m=64, block_h=256,
                      compute_dtype=jnp.float32)
    jax.block_until_ready(out)
    assert out.shape == (B, T, C) and out.dtype == x.dtype
    assert jnp.allclose(out, ref, atol=1e-4, rtol=1e-4), "f32 (H-tiled) mismatch"

    # 2) f32 math, full-H resident weights -> exercises the no-accumulator path.
    out_full = mlp_forward(x, w1, b1, w2, b2, compute_dtype=jnp.float32)
    jax.block_until_ready(out_full)
    assert jnp.allclose(out_full, ref, atol=1e-4, rtol=1e-4), "f32 (full-H) mismatch"

    # 3) Default bf16 MXU path (f32 GELU/bias/accumulation, output keeps f32).
    out_bf16 = mlp_forward(x, w1, b1, w2, b2)
    jax.block_until_ready(out_bf16)
    assert out_bf16.dtype == x.dtype
    assert jnp.allclose(out_bf16, ref, atol=3e-2, rtol=3e-2), \
        "bf16 mismatch vs f32 reference"

    print("KERNEL_OK")
</pallas_src>

<mosaic_0001>
module attributes {stable_mosaic.version = 11 : i64} {
  func.func @_mlp_kernel_tiled(%arg0: i32, %arg1: i32, %arg2: memref<64x128xf32, #tpu.memory_space<vmem>>, %arg3: memref<128x256xf32, #tpu.memory_space<vmem>>, %arg4: memref<1x256xf32, #tpu.memory_space<vmem>>, %arg5: memref<256x128xf32, #tpu.memory_space<vmem>>, %arg6: memref<1x128xf32, #tpu.memory_space<vmem>>, %arg7: memref<64x128xf32, #tpu.memory_space<vmem>>, %arg8: memref<64x128xf32, #tpu.memory_space<vmem>>) attributes {dimension_semantics = [#tpu.dimension_semantics<parallel>, #tpu.dimension_semantics<arbitrary>], iteration_bounds = array<i64: 2, 2>, scalar_prefetch = 0 : i64, scratch_operands = 1 : i64, tpu.core_type = #tpu.core_type<tc>, window_params = [{transform_indices = @transform_0, window_bounds = array<i64: 64, 128>}, {transform_indices = @transform_1, window_bounds = array<i64: 128, 256>}, {transform_indices = @transform_2, window_bounds = array<i64: 1, 256>}, {transform_indices = @transform_3, window_bounds = array<i64: 256, 128>}, {pipeline_mode = #tpu.pipeline_mode<synchronous>, transform_indices = @transform_4, window_bounds = array<i64: 1, 128>}, {transform_indices = @transform_5, window_bounds = array<i64: 64, 128>}]} {
    %c0_i32 = arith.constant 0 : i32
    %0 = arith.cmpi eq, %arg1, %c0_i32 : i32
    %1 = arith.extui %0 : i1 to i32
    %c0_i32_0 = arith.constant 0 : i32
    %2 = arith.cmpi ne, %1, %c0_i32_0 : i32
    scf.if %2 {
      %cst_18 = arith.constant 0.000000e+00 : f32
      %31 = vector.broadcast %cst_18 : f32 to vector<64x128xf32>
      %c0_19 = arith.constant 0 : index
      %c0_20 = arith.constant 0 : index
      %32 = vector.load %arg8[%c0_19, %c0_20] : memref<64x128xf32, #tpu.memory_space<vmem>>, vector<64x128xf32>
      tpu.vector_store %arg8[%c0_19, %c0_20], %31 {strides = array<i32>} : memref<64x128xf32, #tpu.memory_space<vmem>>, vector<64x128xf32>,
    } else {
    }
    %c0 = arith.constant 0 : index
    %c0_1 = arith.constant 0 : index
    %3 = vector.load %arg2[%c0, %c0_1] : memref<64x128xf32, #tpu.memory_space<vmem>>, vector<64x128xf32>
    %c0_2 = arith.constant 0 : index
    %c0_3 = arith.constant 0 : index
    %4 = vector.load %arg3[%c0_2, %c0_3] : memref<128x256xf32, #tpu.memory_space<vmem>>, vector<128x256xf32>
    %cst = arith.constant dense<0.000000e+00> : vector<64x256xf32>
    %5 = tpu.matmul %3, %4, %cst {dimension_numbers = #tpu.dot_dimension_numbers<[1], [0], [0], [1], [0, 0, 1, 1], [], []>} : vector<64x128xf32>, vector<128x256xf32>, vector<64x256xf32> -> vector<64x256xf32>
    %c0_4 = arith.constant 0 : index
    %c0_5 = arith.constant 0 : index
    %6 = vector.load %arg4[%c0_4, %c0_5] : memref<1x256xf32, #tpu.memory_space<vmem>>, vector<1x256xf32>
    %7 = vector.broadcast %6 : vector<1x256xf32> to vector<64x256xf32>
    %8 = arith.addf %5, %7 : vector<64x256xf32>
    %cst_6 = arith.constant 1.59576917 : f32
    %9 = vector.broadcast %cst_6 : f32 to vector<64x256xf32>
    %10 = arith.mulf %9, %8 : vector<64x256xf32>
    %cst_7 = arith.constant 4.471500e-02 : f32
    %11 = vector.broadcast %cst_7 : f32 to vector<64x256xf32>
    %12 = arith.mulf %11, %8 : vector<64x256xf32>
    %13 = arith.mulf %12, %8 : vector<64x256xf32>
    %cst_8 = arith.constant 1.000000e+00 : f32
    %14 = vector.broadcast %cst_8 : f32 to vector<64x256xf32>
    %15 = arith.addf %14, %13 : vector<64x256xf32>
    %16 = arith.mulf %10, %15 : vector<64x256xf32>
    %17 = arith.negf %16 : vector<64x256xf32>
    %18 = math.exp %17 : vector<64x256xf32>
    %cst_9 = arith.constant 1.000000e+00 : f32
    %19 = vector.broadcast %cst_9 : f32 to vector<64x256xf32>
    %20 = arith.addf %19, %18 : vector<64x256xf32>
    %21 = arith.divf %19, %20 : vector<64x256xf32>
    %22 = arith.mulf %8, %21 : vector<64x256xf32>
    %c0_10 = arith.constant 0 : index
    %c0_11 = arith.constant 0 : index
    %23 = vector.load %arg8[%c0_10, %c0_11] : memref<64x128xf32, #tpu.memory_space<vmem>>, vector<64x128xf32>
    %c0_12 = arith.constant 0 : index
    %c0_13 = arith.constant 0 : index
    %24 = vector.load %arg5[%c0_12, %c0_13] : memref<256x128xf32, #tpu.memory_space<vmem>>, vector<256x128xf32>
    %cst_14 = arith.constant dense<0.000000e+00> : vector<64x128xf32>
    %25 = tpu.matmul %22, %24, %cst_14 {dimension_numbers = #tpu.dot_dimension_numbers<[1], [0], [0], [1], [0, 0, 1, 1], [], []>} : vector<64x256xf32>, vector<256x128xf32>, vector<64x128xf32> -> vector<64x128xf32>
    %26 = arith.addf %23, %25 : vector<64x128xf32>
    %c0_15 = arith.constant 0 : index
    %c0_16 = arith.constant 0 : index
    %27 = vector.load %arg8[%c0_15, %c0_16] : memref<64x128xf32, #tpu.memory_space<vmem>>, vector<64x128xf32>
    tpu.vector_store %arg8[%c0_15, %c0_16], %26 {strides = array<i32>} : memref<64x128xf32, #tpu.memory_space<vmem>>, vector<64x128xf32>,
    %c1_i32 = arith.constant 1 : i32
    %28 = arith.cmpi eq, %arg1, %c1_i32 : i32
    %29 = arith.extui %28 : i1 to i32
    %c0_i32_17 = arith.constant 0 : i32
    %30 = arith.cmpi ne, %29, %c0_i32_17 : i32
    scf.if %30 {
      %c0_18 = arith.constant 0 : index
      %c0_19 = arith.constant 0 : index
      %31 = vector.load %arg8[%c0_18, %c0_19] : memref<64x128xf32, #tpu.memory_space<vmem>>, vector<64x128xf32>
      %c0_20 = arith.constant 0 : index
      %c0_21 = arith.constant 0 : index
      %32 = vector.load %arg6[%c0_20, %c0_21] : memref<1x128xf32, #tpu.memory_space<vmem>>, vector<1x128xf32>
      %33 = vector.broadcast %32 : vector<1x128xf32> to vector<64x128xf32>
      %34 = arith.addf %31, %33 : vector<64x128xf32>
      %c0_22 = arith.constant 0 : index
      %c0_23 = arith.constant 0 : index
      %35 = vector.load %arg7[%c0_22, %c0_23] : memref<64x128xf32, #tpu.memory_space<vmem>>, vector<64x128xf32>
      tpu.vector_store %arg7[%c0_22, %c0_23], %34 {strides = array<i32>} : memref<64x128xf32, #tpu.memory_space<vmem>>, vector<64x128xf32>,
    } else {
    }
    return
  }
  func.func @transform_0(%arg0: i32, %arg1: i32) -> (i32, i32) {
    %c0_i32 = arith.constant 0 : i32
    %c0_i32_0 = arith.constant 0 : i32
    return %arg0, %c0_i32 : i32, i32
  }
  func.func @transform_1(%arg0: i32, %arg1: i32) -> (i32, i32) {
    %c0_i32 = arith.constant 0 : i32
    %c0_i32_0 = arith.constant 0 : i32
    return %c0_i32, %arg1 : i32, i32
  }
  func.func @transform_2(%arg0: i32, %arg1: i32) -> (i32, i32) {
    %c0_i32 = arith.constant 0 : i32
    %c0_i32_0 = arith.constant 0 : i32
    return %c0_i32, %arg1 : i32, i32
  }
  func.func @transform_3(%arg0: i32, %arg1: i32) -> (i32, i32) {
    %c0_i32 = arith.constant 0 : i32
    %c0_i32_0 = arith.constant 0 : i32
    return %arg1, %c0_i32 : i32, i32
  }
  func.func @transform_4(%arg0: i32, %arg1: i32) -> (i32, i32) {
    %c0_i32 = arith.constant 0 : i32
    %c0_i32_0 = arith.constant 0 : i32
    %c0_i32_1 = arith.constant 0 : i32
    return %c0_i32, %c0_i32_0 : i32, i32
  }
  func.func @transform_5(%arg0: i32, %arg1: i32) -> (i32, i32) {
    %c0_i32 = arith.constant 0 : i32
    %c0_i32_0 = arith.constant 0 : i32
    return %arg0, %c0_i32 : i32, i32
  }
}

</mosaic_0001>

<llo_original>
// kernel: tpu_custom_call.1
$region0: #{tpu_custom_call.1}
  #allocation0 [shape = 'u32[]', space=smem, size = 0x4, offset = 0x4, fixed_abs, tag = 'smem constant byte address 0x4 - core index']
  #allocation1 [shape = 'u32[144,128]{1,0:T(1,128)}', space=vmem, size = 0x12000, scoped, tag = 'internal scratch']
  #allocation2 [shape = 'f32[64,128]{1,0:T(8,128)}', space=vmem, size = 0x8000, scoped, tag = 'scratch operand']
  %s0 = inlined_call_operand.hbm [shape: f32[128,128], index: 0, kind: input, shape index: {}]
  %s1 = inlined_call_operand.hbm [shape: f32[128,512], index: 1, kind: input, shape index: {}]
  %s2 = inlined_call_operand.vmem [shape: f32[1,512], index: 2, kind: input, shape index: {}]
  %s3 = inlined_call_operand.hbm [shape: f32[512,128], index: 3, kind: input, shape index: {}]
  %s4 = inlined_call_operand.vmem [shape: f32[1,128], index: 4, kind: input, shape index: {}]
  %s5 = inlined_call_operand.hbm [shape: f32[128,128], index: 5, kind: output, shape index: {}]
  %s6 = sld [smem:[#allocation0]]
  $region73: #{tpu_custom_call.1} parent=0
    _
  %s8 = ssub.s32 1, %s6
  %s9 = scalar_select 0, %s8, %s6
  $region1: #{tpu_custom_call.1} parent=0
    #allocation3 [shape = 'u8[65536]{0}', space=vmem, size = 0x10000, scoped, tag = 'input window, operand 0']
    #allocation4 [shape = 's32[2]{0}', space=sflag, size = 0x8, scoped, tag = 'scoped memory for tpu_custom_call.1']
    #allocation5 [shape = 's32[2]{0}', space=sflag, size = 0x8, scoped, tag = 'scoped memory for tpu_custom_call.1']
    #allocation6 [shape = 'u8[262144]{0}', space=vmem, size = 0x40000, scoped, tag = 'input window, operand 1']
    #allocation7 [shape = 's32[2]{0}', space=sflag, size = 0x8, scoped, tag = 'scoped memory for tpu_custom_call.1']
    #allocation8 [shape = 'u8[262144]{0}', space=vmem, size = 0x40000, scoped, tag = 'input window, operand 3']
    #allocation9 [shape = 'u8[65536]{0}', space=vmem, size = 0x10000, scoped, tag = 'output window, operand 0']
    %10 = vsyncpa [#allocation4], 0
    %s11 = scalar_lea.sflag [#allocation4], 1
    %12 = vsyncpa %s11, 0
    %13 = vsyncpa [#allocation7], 0
    %s14 = scalar_lea.sflag [#allocation7], 1
    %15 = vsyncpa %s14, 0
    %16 = vsyncpa [#allocation5], 0
    %s17 = scalar_lea.sflag [#allocation5], 1
    %18 = vsyncpa %s17, 0
    loop: start=0, step=1, limit=6
    $region2: #{tpu_custom_call.1} parent=1 // loop_pre_header
      _
    $region3: #{tpu_custom_call.1} parent=1 // loop_header
      %s20 = sphi 0, %s24
      %p21 = scmp.ge.s32.totalorder %s20, 6
      %s27 = sphi 0, %s39
      %s28 = sphi 0, %s35
      %s29 = sphi 0, %s27
      %s30 = sphi 0, %s28
      %s31 = sphi 0, %s29
      %s32 = sphi 0, %s30
      %s42 = sphi 0, %s44
      %s45 = sphi 0, %s42
      %s46 = sphi 0, %s45
      %s62 = sphi 0, %s46
      %s68 = sphi 0, %s70
      %s71 = sphi 0, %s68
      %s72 = sphi 0, %s71
      %s88 = sphi 0, %s72
      %s94 = sphi 0, %s96
      %s97 = sphi 0, %s94
      %s98 = sphi 0, %s97
      %s114 = sphi 0, %s98
      %s120 = sphi 0, %s122
      %s123 = sphi 0, %s120
      %s124 = sphi 0, %s123
      %s140 = sphi 0, %s124
      %s144 = sphi 0, %s144
      %s146 = sphi 0, %s144
      %s147 = sphi 0, %s146
      %s161 = sphi 0, %s147
      %s167 = sphi 0, %s169
      %s170 = sphi 0, %s167
      %s171 = sphi 0, %s170
      %s187 = sphi 0, %s171
    $region4: #{tpu_custom_call.1} parent=1 // loop_header_branch
      %23 = sbr.rel (%p21) target = $region8
    $region5: #{tpu_custom_call.1} parent=1 // loop_body
      %s25 = ssub.s32 %s20, 1
      %s26 = ssub.s32 %s20, 2
      %s33 = sadd.s32 1, %s28
      %p34 = scmp.ge.s32.totalorder %s33, 2
      %s35 = scalar_select %p34, 0, %s33
      %s36 = sadd.s32 1, %s27
      %s37 = scalar_select %p34, %s36, %s27
      %p38 = scmp.ge.s32.totalorder %s37, 2
      %s39 = scalar_select %p38, 0, %s37
      %s40 = ssub.s32 %s27, %s39
      %p41 = scmp.eq.s32.totalorder %s40, 0
      %s43 = sadd.s32 %s42, 1
      %s44 = scalar_select %p41, %s42, %s43
      %p47 = pneg %p41
      %p48 = scmp.eq.s32.totalorder %s20, 3
      %p49 = por %p47, %p48
      %p50 = scmp.ne.s32.totalorder %s42, %s45
      %p51 = scmp.eq.s32.totalorder %s20, 0
      %p52 = por %p50, %p51
      %p53 = scmp.ne.s32.totalorder %s42, %s45
      %p54 = scmp.eq.s32.totalorder %s25, 3
      %p55 = por %p53, %p54
      %p56 = scmp.ne.s32.totalorder %s45, %s46
      %p57 = scmp.eq.s32.totalorder %s25, 0
      %p58 = por %p56, %p57
      %p59 = scmp.ne.s32.totalorder %s45, %s46
      %p60 = scmp.eq.s32.totalorder %s26, 3
      %p61 = por %p59, %p60
      %p63 = scmp.ne.s32.totalorder %s46, %s62
      %p64 = scmp.eq.s32.totalorder %s26, 0
      %p65 = por %p63, %p64
      %s66 = ssub.s32 %s28, %s35
      %p67 = scmp.eq.s32.totalorder %s66, 0
      %s69 = sadd.s32 %s68, 1
      %s70 = scalar_select %p67, %s68, %s69
      %p73 = pneg %p67
      %p74 = scmp.eq.s32.totalorder %s20, 3
      %p75 = por %p73, %p74
      %p76 = scmp.ne.s32.totalorder %s68, %s71
      %p77 = scmp.eq.s32.totalorder %s20, 0
      %p78 = por %p76, %p77
      %p79 = scmp.ne.s32.totalorder %s68, %s71
      %p80 = scmp.eq.s32.totalorder %s25, 3
      %p81 = por %p79, %p80
      %p82 = scmp.ne.s32.totalorder %s71, %s72
      %p83 = scmp.eq.s32.totalorder %s25, 0
      %p84 = por %p82, %p83
      %p85 = scmp.ne.s32.totalorder %s71, %s72
      %p86 = scmp.eq.s32.totalorder %s26, 3
      %p87 = por %p85, %p86
      %p89 = scmp.ne.s32.totalorder %s72, %s88
      %p90 = scmp.eq.s32.totalorder %s26, 0
      %p91 = por %p89, %p90
      %s92 = ssub.s32 %s28, %s35
      %p93 = scmp.eq.s32.totalorder %s92, 0
      %s95 = sadd.s32 %s94, 1
      %s96 = scalar_select %p93, %s94, %s95
      %p99 = pneg %p93
      %p100 = scmp.eq.s32.totalorder %s20, 3
      %p101 = por %p99, %p100
      %p102 = scmp.ne.s32.totalorder %s94, %s97
      %p103 = scmp.eq.s32.totalorder %s20, 0
      %p104 = por %p102, %p103
      %p105 = scmp.ne.s32.totalorder %s94, %s97
      %p106 = scmp.eq.s32.totalorder %s25, 3
      %p107 = por %p105, %p106
      %p108 = scmp.ne.s32.totalorder %s97, %s98
      %p109 = scmp.eq.s32.totalorder %s25, 0
      %p110 = por %p108, %p109
      %p111 = scmp.ne.s32.totalorder %s97, %s98
      %p112 = scmp.eq.s32.totalorder %s26, 3
      %p113 = por %p111, %p112
      %p115 = scmp.ne.s32.totalorder %s98, %s114
      %p116 = scmp.eq.s32.totalorder %s26, 0
      %p117 = por %p115, %p116
      %s118 = ssub.s32 %s28, %s35
      %p119 = scmp.eq.s32.totalorder %s118, 0
      %s121 = sadd.s32 %s120, 1
      %s122 = scalar_select %p119, %s120, %s121
      %p125 = pneg %p119
      %p126 = scmp.eq.s32.totalorder %s20, 3
      %p127 = por %p125, %p126
      %p128 = scmp.ne.s32.totalorder %s120, %s123
      %p129 = scmp.eq.s32.totalorder %s20, 0
      %p130 = por %p128, %p129
      %p131 = scmp.ne.s32.totalorder %s120, %s123
      %p132 = scmp.eq.s32.totalorder %s25, 3
      %p133 = por %p131, %p132
      %p134 = scmp.ne.s32.totalorder %s123, %s124
      %p135 = scmp.eq.s32.totalorder %s25, 0
      %p136 = por %p134, %p135
      %p137 = scmp.ne.s32.totalorder %s123, %s124
      %p138 = scmp.eq.s32.totalorder %s26, 3
      %p139 = por %p137, %p138
      %p141 = scmp.ne.s32.totalorder %s124, %s140
      %p142 = scmp.eq.s32.totalorder %s26, 0
      %p143 = por %p141, %p142
      %s145 = sadd.s32 %s144, 1
      %p148 = scmp.eq.s32.totalorder %s20, 3
      %p149 = scmp.ne.s32.totalorder %s144, %s146
      %p150 = scmp.eq.s32.totalorder %s20, 0
      %p151 = por %p149, %p150
      %p152 = scmp.ne.s32.totalorder %s144, %s146
      %p153 = scmp.eq.s32.totalorder %s25, 3
      %p154 = por %p152, %p153
      %p155 = scmp.ne.s32.totalorder %s146, %s147
      %p156 = scmp.eq.s32.totalorder %s25, 0
      %p157 = por %p155, %p156
      %p158 = scmp.ne.s32.totalorder %s146, %s147
      %p159 = scmp.eq.s32.totalorder %s26, 3
      %p160 = por %p158, %p159
      %p162 = scmp.ne.s32.totalorder %s147, %s161
      %p163 = scmp.eq.s32.totalorder %s26, 0
      %p164 = por %p162, %p163
      %s165 = ssub.s32 %s27, %s39
      %p166 = scmp.eq.s32.totalorder %s165, 0
      %s168 = sadd.s32 %s167, 1
      %s169 = scalar_select %p166, %s167, %s168
      %p172 = pneg %p166
      %p173 = scmp.eq.s32.totalorder %s20, 3
      %p174 = por %p172, %p173
      %p175 = scmp.ne.s32.totalorder %s167, %s170
      %p176 = scmp.eq.s32.totalorder %s20, 0
      %p177 = por %p175, %p176
      %p178 = scmp.ne.s32.totalorder %s167, %s170
      %p179 = scmp.eq.s32.totalorder %s25, 3
      %p180 = por %p178, %p179
      %p181 = scmp.ne.s32.totalorder %s170, %s171
      %p182 = scmp.eq.s32.totalorder %s25, 0
      %p183 = por %p181, %p182
      %p184 = scmp.ne.s32.totalorder %s170, %s171
      %p185 = scmp.eq.s32.totalorder %s26, 3
      %p186 = por %p184, %p185
      %p188 = scmp.ne.s32.totalorder %s171, %s187
      %p189 = scmp.eq.s32.totalorder %s26, 0
      %p190 = por %p188, %p189
      %p191 = scmp.le.s32.totalorder 1, %s20
      %p192 = scmp.lt.s32.totalorder %s20, 5
      %p193 = pnand %p191, %p192
      %p194 = pneg %p193
      // Predicated region
      $region9: #{tpu_custom_call.1} parent=5 // pred_check
        _
      $region10: #{tpu_custom_call.1} parent=5 // pred_check_branch
        %196 = sbr.rel (%p193) target = $region12
      $region11: #{tpu_custom_call.1} parent=5 // pred_region
        %s197 = ssub.s32 %s20, 1
        // Predicated region
        $region13: #{tpu_custom_call.1} parent=11 // pred_check
          %p198 = pneg %p157
        $region14: #{tpu_custom_call.1} parent=11 // pred_check_branch
          %200 = sbr.rel (%p198) target = $region16
        $region15: #{tpu_custom_call.1} parent=11 // pred_region
          _
        $region16: #{tpu_custom_call.1} parent=11 // pred_fallthru
          _
      $region12: #{tpu_custom_call.1} parent=5 // pred_fallthru
        _
      %p201 = scmp.lt.s32.totalorder %s20, 4
      // Predicated region
      $region17: #{tpu_custom_call.1} parent=5 // pred_check
        %p202 = pneg %p201
      $region18: #{tpu_custom_call.1} parent=5 // pred_check_branch
        %204 = sbr.rel (%p202) target = $region20
      $region19: #{tpu_custom_call.1} parent=5 // pred_region
        // Predicated region
        $region21: #{tpu_custom_call.1} parent=19 // pred_check
          %p205 = pneg %p52
        $region22: #{tpu_custom_call.1} parent=19 // pred_check_branch
          %207 = sbr.rel (%p205) target = $region24
        $region23: #{tpu_custom_call.1} parent=19 // pred_region
          %s208 = sand.u32 %s42, 1
          %s209 = scalar_lea.sflag [#allocation4], %s208
          %s210 = sand.u32 %s42, 1
          %s211 = smul.addr %s210, 64
          %s212 = scalar_lea.vmem [#allocation3], %s211
          %s213 = smul.u32 8, %s27
          %s215 = ssub.s32 1024, 1024
          %216 = vsyncadd %s209, %s215
          %s217 = smul.addr %s213, 128
          %s218 = scalar_lea.hbm %s0, %s217
          %s219 = sshll.u32 %s212, 4
          %s220 = int_to_ptr.vmem [resolvable:$true] %s219
          %225 = dma.hbm_to_vmem [thread:$0]  %s218, 1024, %s220, %s209, 128, 128, 8
        $region24: #{tpu_custom_call.1} parent=19 // pred_fallthru
          _
        // Predicated region
        $region25: #{tpu_custom_call.1} parent=19 // pred_check
          %p226 = pneg %p78
        $region26: #{tpu_custom_call.1} parent=19 // pred_check_branch
          %228 = sbr.rel (%p226) target = $region28
        $region27: #{tpu_custom_call.1} parent=19 // pred_region
          %s229 = sand.u32 %s20, 1
          %s230 = scalar_lea.sflag [#allocation7], %s229
          %s231 = sand.u32 %s68, 1
          %s232 = smul.addr %s231, 256
          %s233 = scalar_lea.vmem [#allocation6], %s232
          %s234 = smul.u32 2, %s28
          %s236 = ssub.s32 4096, 4096
          %237 = vsyncadd %s230, %s236
          %s238 = smul.addr %s234, 128
          %s239 = scalar_lea.hbm %s1, %s238
          %s240 = sshll.u32 %s233, 4
          %s241 = int_to_ptr.vmem [resolvable:$true] %s240
          %246 = dma.hbm_to_vmem [thread:$0]  %s239, 4096, %s241, %s230, 512, 256, 16
        $region28: #{tpu_custom_call.1} parent=19 // pred_fallthru
          _
        // Predicated region
        $region29: #{tpu_custom_call.1} parent=19 // pred_check
          %p247 = pneg %p104
        $region30: #{tpu_custom_call.1} parent=19 // pred_check_branch
          %249 = sbr.rel (%p247) target = $region32
        $region31: #{tpu_custom_call.1} parent=19 // pred_region
          %s250 = smul.u32 2, %s28
          %p251 = scmp.lt.s32.totalorder %s250, 3
          %s252 = scalar_select %p251, %s250, 3
          %s253 = scalar_lea.vmem %s2, %s252
          %s254 = smul.u32 2, %s28
        $region32: #{tpu_custom_call.1} parent=19 // pred_fallthru
          _
        // Predicated region
        $region33: #{tpu_custom_call.1} parent=19 // pred_check
          %p255 = pneg %p130
        $region34: #{tpu_custom_call.1} parent=19 // pred_check_branch
          %257 = sbr.rel (%p255) target = $region36
        $region35: #{tpu_custom_call.1} parent=19 // pred_region
          %s258 = sand.u32 %s20, 1
          %s259 = scalar_lea.sflag [#allocation7], %s258
          %s260 = sand.u32 %s120, 1
          %s261 = smul.addr %s260, 256
          %s262 = scalar_lea.vmem [#allocation8], %s261
          %s263 = smul.u32 32, %s28
          %s265 = ssub.s32 4096, 4096
          %266 = vsyncadd %s259, %s265
          %s267 = smul.addr %s263, 128
          %s268 = scalar_lea.hbm %s3, %s267
          %s269 = sshll.u32 %s262, 4
          %s270 = int_to_ptr.vmem [resolvable:$true] %s269
          %275 = dma.hbm_to_vmem [thread:$0]  %s268, 4096, %s270, %s259, 128, 128, 8
        $region36: #{tpu_custom_call.1} parent=19 // pred_fallthru
          _
      $region20: #{tpu_custom_call.1} parent=5 // pred_fallthru
        _
      %p276 = scmp.le.s32.totalorder 1, %s20
      %p277 = scmp.lt.s32.totalorder %s20, 5
      %p278 = pnand %p276, %p277
      %p279 = pneg %p278
      // Predicated region
      $region37: #{tpu_custom_call.1} parent=5 // pred_check
        _
      $region38: #{tpu_custom_call.1} parent=5 // pred_check_branch
        %281 = sbr.rel (%p278) target = $region40
      $region39: #{tpu_custom_call.1} parent=5 // pred_region
        %s282 = ssub.s32 %s20, 1
        %s283 = sand.u32 %s45, 1
        %s284 = scalar_lea.sflag [#allocation4], %s283
        %s285 = sand.u32 %s45, 1
        %s286 = smul.addr %s285, 64
        %s287 = scalar_lea.vmem [#allocation3], %s286
        // Predicated region
        $region41: #{tpu_custom_call.1} parent=39 // pred_check
          %p288 = pneg %p58
        $region42: #{tpu_custom_call.1} parent=39 // pred_check_branch
          %290 = sbr.rel (%p288) target = $region44
        $region43: #{tpu_custom_call.1} parent=39 // pred_region
          %291 = dma.done %s284, 1024
        $region44: #{tpu_custom_call.1} parent=39 // pred_fallthru
          _
        %s292 = sand.u32 %s25, 1
        %s293 = scalar_lea.sflag [#allocation7], %s292
        %s294 = sand.u32 %s71, 1
        %s295 = smul.addr %s294, 256
        %s296 = scalar_lea.vmem [#allocation6], %s295
        // Predicated region
        $region45: #{tpu_custom_call.1} parent=39 // pred_check
          %p297 = pneg %p84
        $region46: #{tpu_custom_call.1} parent=39 // pred_check_branch
          %299 = sbr.rel (%p297) target = $region48
        $region47: #{tpu_custom_call.1} parent=39 // pred_region
          %300 = dma.done %s293, 4096
        $region48: #{tpu_custom_call.1} parent=39 // pred_fallthru
          _
        %s301 = sand.u32 %s25, 1
        %s302 = scalar_lea.sflag [#allocation7], %s301
        %s303 = sand.u32 %s123, 1
        %s304 = smul.addr %s303, 256
        %s305 = scalar_lea.vmem [#allocation8], %s304
        // Predicated region
        $region49: #{tpu_custom_call.1} parent=39 // pred_check
          %p306 = pneg %p136
        $region50: #{tpu_custom_call.1} parent=39 // pred_check_branch
          %308 = sbr.rel (%p306) target = $region52
        $region51: #{tpu_custom_call.1} parent=39 // pred_region
          %309 = dma.done %s302, 4096
        $region52: #{tpu_custom_call.1} parent=39 // pred_fallthru
          _
        %s310 = sand.u32 %s45, 1
        %s311 = scalar_lea.sflag [#allocation4], %s310
        %s312 = sand.u32 %s45, 1
        %s313 = smul.addr %s312, 64
        %s314 = scalar_lea.vmem [#allocation3], %s313
        %p315 = pneg %p58
        %p316 = pneg %p55
        %s317 = sand.u32 %s25, 1
        %s318 = scalar_lea.sflag [#allocation7], %s317
        %s319 = sand.u32 %s71, 1
        %s320 = smul.addr %s319, 256
        %s321 = scalar_lea.vmem [#allocation6], %s320
        %p322 = pneg %p84
        %p323 = pneg %p81
        %s324 = smul.u32 2, %s30
        %p325 = scmp.lt.s32.totalorder %s324, 3
        %s326 = scalar_select %p325, %s324, 3
        %s327 = scalar_lea.vmem %s2, %s326
        %p328 = pneg %p110
        %p329 = pneg %p107
        %s330 = sand.u32 %s25, 1
        %s331 = scalar_lea.sflag [#allocation7], %s330
        %s332 = sand.u32 %s123, 1
        %s333 = smul.addr %s332, 256
        %s334 = scalar_lea.vmem [#allocation8], %s333
        %p335 = pneg %p136
        %p336 = pneg %p133
        %p337 = pneg %p157
        %p338 = pneg %p154
        %p339 = pneg %p183
        %p340 = pneg %p180
        %s341 = sand.u32 %s170, 1
        %s342 = scalar_lea.sflag [#allocation5], %s341
        %s343 = sand.u32 %s170, 1
        %s344 = smul.addr %s343, 64
        %s345 = scalar_lea.vmem [#allocation9], %s344
        %s346 = smul.u32 8, %s29
        %s347 = smul.u32 2, %s30
        %s348 = smul.u32 2, %s30
        %p349 = scmp.lt.s32.totalorder %s348, 3
        %s350 = scalar_select %p349, %s348, 3
        %s351 = scalar_lea.vmem %s2, %s350
        %s352 = smul.u32 2, %s30
        %s353 = smul.u32 32, %s30
        %s354 = smul.u32 8, %s29
        %p355 = scmp.eq.s32.totalorder %s30, 0
        // Predicated region
        $region53: #{tpu_custom_call.1} parent=39 // pred_check
          %p356 = pneg %p355
        $region54: #{tpu_custom_call.1} parent=39 // pred_check_branch
          %358 = sbr.rel (%p356) target = $region56
        $region55: #{tpu_custom_call.1} parent=39 // pred_region
          %359 = vst [vmem:[#allocation2] sm:$0xff] 0.0
          %360 = vst [vmem:[#allocation2 + $0x8] sm:$0xff] 0.0
          %361 = vst [vmem:[#allocation2 + $0x10] sm:$0xff] 0.0
          %362 = vst [vmem:[#allocation2 + $0x18] sm:$0xff] 0.0
          %363 = vst [vmem:[#allocation2 + $0x20] sm:$0xff] 0.0
          %364 = vst [vmem:[#allocation2 + $0x28] sm:$0xff] 0.0
          %365 = vst [vmem:[#allocation2 + $0x30] sm:$0xff] 0.0
          %366 = vst [vmem:[#allocation2 + $0x38] sm:$0xff] 0.0
        $region56: #{tpu_custom_call.1} parent=39 // pred_fallthru
          _
        %v367 = vld [vmem:[%s287] sm:$0xff]
        %v368 = vld [vmem:[%s287 + $0x8] sm:$0xff]
        %v369 = vld [vmem:[%s287 + $0x10] sm:$0xff]
        %v370 = vld [vmem:[%s287 + $0x18] sm:$0xff]
        %v371 = vld [vmem:[%s287 + $0x20] sm:$0xff]
        %v372 = vld [vmem:[%s287 + $0x28] sm:$0xff]
        %v373 = vld [vmem:[%s287 + $0x30] sm:$0xff]
        %v374 = vld [vmem:[%s287 + $0x38] sm:$0xff]
        %v375 = vld [vmem:[%s296] sm:$0xff]
        %v376 = vld [vmem:[%s296 + $0x8] sm:$0xff]
        %v377 = vld [vmem:[%s296 + $0x10] sm:$0xff]
        %v378 = vld [vmem:[%s296 + $0x18] sm:$0xff]
        %v379 = vld [vmem:[%s296 + $0x20] sm:$0xff]
        %v380 = vld [vmem:[%s296 + $0x28] sm:$0xff]
        %v381 = vld [vmem:[%s296 + $0x30] sm:$0xff]
        %v382 = vld [vmem:[%s296 + $0x38] sm:$0xff]
        %v383 = vld [vmem:[%s296 + $0x40] sm:$0xff]
        %v384 = vld [vmem:[%s296 + $0x48] sm:$0xff]
        %v385 = vld [vmem:[%s296 + $0x50] sm:$0xff]
        %v386 = vld [vmem:[%s296 + $0x58] sm:$0xff]
        %v387 = vld [vmem:[%s296 + $0x60] sm:$0xff]
        %v388 = vld [vmem:[%s296 + $0x68] sm:$0xff]
        %v389 = vld [vmem:[%s296 + $0x70] sm:$0xff]
        %v390 = vld [vmem:[%s296 + $0x78] sm:$0xff]
        %v391 = vld [vmem:[%s296 + $0x80] sm:$0xff]
        %v392 = vld [vmem:[%s296 + $0x88] sm:$0xff]
        %v393 = vld [vmem:[%s296 + $0x90] sm:$0xff]
        %v394 = vld [vmem:[%s296 + $0x98] sm:$0xff]
        %v395 = vld [vmem:[%s296 + $0xa0] sm:$0xff]
        %v396 = vld [vmem:[%s296 + $0xa8] sm:$0xff]
        %v397 = vld [vmem:[%s296 + $0xb0] sm:$0xff]
        %v398 = vld [vmem:[%s296 + $0xb8] sm:$0xff]
        %v399 = vld [vmem:[%s296 + $0xc0] sm:$0xff]
        %v400 = vld [vmem:[%s296 + $0xc8] sm:$0xff]
        %v401 = vld [vmem:[%s296 + $0xd0] sm:$0xff]
        %v402 = vld [vmem:[%s296 + $0xd8] sm:$0xff]
        %v403 = vld [vmem:[%s296 + $0xe0] sm:$0xff]
        %v404 = vld [vmem:[%s296 + $0xe8] sm:$0xff]
        %v405 = vld [vmem:[%s296 + $0xf0] sm:$0xff]
        %v406 = vld [vmem:[%s296 + $0xf8] sm:$0xff]
        %v407 = vld [vmem:[%s351] sm:$0x3]
        %v409 = vlaneseq
        %v410 = vshrl.u32 %v409, 7
        %v411 = vsub.s32 0, %v410
        %v412 = vrot.slane %v407, %v411
        %v413 = vlaneseq
        %v414 = vshrl.u32 %v413, 7
        %v415 = vsub.s32 1, %v414
        %v416 = vrot.slane %v407, %v415
        %419 = vmatprep.subr.mxu0 %v376
        %420 = vmatpush1.msra.mxu0 %v375
        %421 = vmatprep.subr.mxu0 %v378
        %422 = vmatpush1.msra.mxu0 %v377
        %423 = vmatprep.subr.mxu0 %v380
        %424 = vmatpush1.msra.mxu0 %v379
        %425 = vmatprep.subr.mxu0 %v382
        %426 = vmatpush1.msra.mxu0 %v381
        %427 = vmatprep.subr.mxu0 %v384
        %428 = vmatpush1.msra.mxu0 %v383
        %429 = vmatprep.subr.mxu0 %v386
        %430 = vmatpush1.msra.mxu0 %v385
        %431 = vmatprep.subr.mxu0 %v388
        %432 = vmatpush1.msra.mxu0 %v387
        %433 = vmatprep.subr.mxu0 %v390
        %434 = vmatpush1.msra.mxu0 %v389
        %435 = vmatprep.subr.mxu0 %v392
        %436 = vmatpush1.msra.mxu0 %v391
        %437 = vmatprep.subr.mxu0 %v394
        %438 = vmatpush1.msra.mxu0 %v393
        %439 = vmatprep.subr.mxu0 %v396
        %440 = vmatpush1.msra.mxu0 %v395
        %441 = vmatprep.subr.mxu0 %v398
        %442 = vmatpush1.msra.mxu0 %v397
        %443 = vmatprep.subr.mxu0 %v400
        %444 = vmatpush1.msra.mxu0 %v399
        %445 = vmatprep.subr.mxu0 %v402
        %446 = vmatpush1.msra.mxu0 %v401
        %447 = vmatprep.subr.mxu0 %v404
        %448 = vmatpush1.msra.mxu0 %v403
        %449 = vmatprep.subr.mxu0 %v406
        %450 = vmatpush1.msra.mxu0 %v405
        %451 = vmatprep.subr.mxu0 0.0
        %452 = vmatpush1.msra.mxu0 0.0
        %453 = vmatprep.subr.mxu0 0.0
        %454 = vmatpush1.msra.mxu0 0.0
        %455 = vmatprep.subr.mxu0 0.0
        %456 = vmatpush1.msra.mxu0 0.0
        %457 = vmatprep.subr.mxu0 0.0
        %458 = vmatpush1.msra.mxu0 0.0
        %459 = vmatprep.subr.mxu0 0.0
        %460 = vmatpush1.msra.mxu0 0.0
        %461 = vmatprep.subr.mxu0 0.0
        %462 = vmatpush1.msra.mxu0 0.0
        %463 = vmatprep.subr.mxu0 0.0
        %464 = vmatpush1.msra.mxu0 0.0
        %465 = vmatprep.subr.mxu0 0.0
        %466 = vmatpush1.msra.mxu0 0.0
        %467 = vmatprep.subr.mxu0 0.0
        %468 = vmatpush1.msra.mxu0 0.0
        %469 = vmatprep.subr.mxu0 0.0
        %470 = vmatpush1.msra.mxu0 0.0
        %471 = vmatprep.subr.mxu0 0.0
        %472 = vmatpush1.msra.mxu0 0.0
        %473 = vmatprep.subr.mxu0 0.0
        %474 = vmatpush1.msra.mxu0 0.0
        %475 = vmatprep.subr.mxu0 0.0
        %476 = vmatpush1.msra.mxu0 0.0
        %477 = vmatprep.subr.mxu0 0.0
        %478 = vmatpush1.msra.mxu0 0.0
        %479 = vmatprep.subr.mxu0 0.0
        %480 = vmatpush1.msra.mxu0 0.0
        %481 = vmatprep.subr.mxu0 0.0
        %482 = vmatpush1.msra.mxu0 0.0
        %483 = vmatprep.mubr.f32.mxu0 0.0
        %484 = vmatmul.mubr.f32.gmra.mrb[0].mxu0 %v367
        %v485 = vpop.f32.mrb[0].mxu0
        %v486 = vadd.f32 %v412, %v485
        %v487 = vpop.f32.mrb[0].mxu0
        %v488 = vadd.f32 %v416, %v487
        %489 = vmatprep.mubr.f32.mxu0 0.0
        %490 = vmatmul.mubr.f32.gmra.mrb[0].mxu0 %v368
        %v491 = vpop.f32.mrb[0].mxu0
        %v492 = vadd.f32 %v412, %v491
        %v493 = vpop.f32.mrb[0].mxu0
        %v494 = vadd.f32 %v416, %v493
        %495 = vmatprep.mubr.f32.mxu0 0.0
        %496 = vmatmul.mubr.f32.gmra.mrb[0].mxu0 %v369
        %v497 = vpop.f32.mrb[0].mxu0
        %v498 = vadd.f32 %v412, %v497
        %v499 = vpop.f32.mrb[0].mxu0
        %v500 = vadd.f32 %v416, %v499
        %501 = vmatprep.mubr.f32.mxu0 0.0
        %502 = vmatmul.mubr.f32.gmra.mrb[0].mxu0 %v370
        %v503 = vpop.f32.mrb[0].mxu0
        %v504 = vadd.f32 %v412, %v503
        %v505 = vpop.f32.mrb[0].mxu0
        %v506 = vadd.f32 %v416, %v505
        %507 = vmatprep.mubr.f32.mxu0 0.0
        %508 = vmatmul.mubr.f32.gmra.mrb[0].mxu0 %v371
        %v509 = vpop.f32.mrb[0].mxu0
        %v510 = vadd.f32 %v412, %v509
        %v511 = vpop.f32.mrb[0].mxu0
        %v512 = vadd.f32 %v416, %v511
        %513 = vmatprep.mubr.f32.mxu0 0.0
        %514 = vmatmul.mubr.f32.gmra.mrb[0].mxu0 %v372
        %v515 = vpop.f32.mrb[0].mxu0
        %v516 = vadd.f32 %v412, %v515
        %v517 = vpop.f32.mrb[0].mxu0
        %v518 = vadd.f32 %v416, %v517
        %519 = vmatprep.mubr.f32.mxu0 0.0
        %520 = vmatmul.mubr.f32.gmra.mrb[0].mxu0 %v373
        %v521 = vpop.f32.mrb[0].mxu0
        %v522 = vadd.f32 %v412, %v521
        %v523 = vpop.f32.mrb[0].mxu0
        %v524 = vadd.f32 %v416, %v523
        %525 = vmatprep.mubr.f32.mxu0 0.0
        %526 = vmatmul.mubr.f32.gmra.mrb[0].mxu0 %v374
        %v527 = vpop.f32.mrb[0].mxu0
        %v528 = vadd.f32 %v412, %v527
        %v529 = vpop.f32.mrb[0].mxu0
        %v530 = vadd.f32 %v416, %v529
        %531 = vdwg.mxu0
        %v532 = vmul.f32 %v486, 1.5957692
        %v533 = vmul.f32 %v488, 1.5957692
        %v534 = vmul.f32 %v492, 1.5957692
        %v535 = vmul.f32 %v494, 1.5957692
        %v536 = vmul.f32 %v498, 1.5957692
        %v537 = vmul.f32 %v500, 1.5957692
        %v538 = vmul.f32 %v504, 1.5957692
        %v539 = vmul.f32 %v506, 1.5957692
        %v540 = vmul.f32 %v510, 1.5957692
        %v541 = vmul.f32 %v512, 1.5957692
        %v542 = vmul.f32 %v516, 1.5957692
        %v543 = vmul.f32 %v518, 1.5957692
        %v544 = vmul.f32 %v522, 1.5957692
        %v545 = vmul.f32 %v524, 1.5957692
        %v546 = vmul.f32 %v528, 1.5957692
        %v547 = vmul.f32 %v530, 1.5957692
        %v548 = vmul.f32 %v486, 0.044715
        %v549 = vmul.f32 %v488, 0.044715
        %v550 = vmul.f32 %v492, 0.044715
        %v551 = vmul.f32 %v494, 0.044715
        %v552 = vmul.f32 %v498, 0.044715
        %v553 = vmul.f32 %v500, 0.044715
        %v554 = vmul.f32 %v504, 0.044715
        %v555 = vmul.f32 %v506, 0.044715
        %v556 = vmul.f32 %v510, 0.044715
        %v557 = vmul.f32 %v512, 0.044715
        %v558 = vmul.f32 %v516, 0.044715
        %v559 = vmul.f32 %v518, 0.044715
        %v560 = vmul.f32 %v522, 0.044715
        %v561 = vmul.f32 %v524, 0.044715
        %v562 = vmul.f32 %v528, 0.044715
        %v563 = vmul.f32 %v530, 0.044715
        %v564 = vmul.f32 %v548, %v486
        %v565 = vmul.f32 %v549, %v488
        %v566 = vmul.f32 %v550, %v492
        %v567 = vmul.f32 %v551, %v494
        %v568 = vmul.f32 %v552, %v498
        %v569 = vmul.f32 %v553, %v500
        %v570 = vmul.f32 %v554, %v504
        %v571 = vmul.f32 %v555, %v506
        %v572 = vmul.f32 %v556, %v510
        %v573 = vmul.f32 %v557, %v512
        %v574 = vmul.f32 %v558, %v516
        %v575 = vmul.f32 %v559, %v518
        %v576 = vmul.f32 %v560, %v522
        %v577 = vmul.f32 %v561, %v524
        %v578 = vmul.f32 %v562, %v528
        %v579 = vmul.f32 %v563, %v530
        %v580 = vadd.f32 %v564, 1.0
        %v581 = vadd.f32 %v565, 1.0
        %v582 = vadd.f32 %v566, 1.0
        %v583 = vadd.f32 %v567, 1.0
        %v584 = vadd.f32 %v568, 1.0
        %v585 = vadd.f32 %v569, 1.0
        %v586 = vadd.f32 %v570, 1.0
        %v587 = vadd.f32 %v571, 1.0
        %v588 = vadd.f32 %v572, 1.0
        %v589 = vadd.f32 %v573, 1.0
        %v590 = vadd.f32 %v574, 1.0
        %v591 = vadd.f32 %v575, 1.0
        %v592 = vadd.f32 %v576, 1.0
        %v593 = vadd.f32 %v577, 1.0
        %v594 = vadd.f32 %v578, 1.0
        %v595 = vadd.f32 %v579, 1.0
        %v596 = vmul.f32 %v532, %v580
        %v597 = vmul.f32 %v533, %v581
        %v598 = vmul.f32 %v534, %v582
        %v599 = vmul.f32 %v535, %v583
        %v600 = vmul.f32 %v536, %v584
        %v601 = vmul.f32 %v537, %v585
        %v602 = vmul.f32 %v538, %v586
        %v603 = vmul.f32 %v539, %v587
        %v604 = vmul.f32 %v540, %v588
        %v605 = vmul.f32 %v541, %v589
        %v606 = vmul.f32 %v542, %v590
        %v607 = vmul.f32 %v543, %v591
        %v608 = vmul.f32 %v544, %v592
        %v609 = vmul.f32 %v545, %v593
        %v610 = vmul.f32 %v546, %v594
        %v611 = vmul.f32 %v547, %v595
        %v612 = vxor.u32 %v596, 2147483648
        %v613 = vxor.u32 %v597, 2147483648
        %v614 = vxor.u32 %v598, 2147483648
        %v615 = vxor.u32 %v599, 2147483648
        %v616 = vxor.u32 %v600, 2147483648
        %v617 = vxor.u32 %v601, 2147483648
        %v618 = vxor.u32 %v602, 2147483648
        %v619 = vxor.u32 %v603, 2147483648
        %v620 = vxor.u32 %v604, 2147483648
        %v621 = vxor.u32 %v605, 2147483648
        %v622 = vxor.u32 %v606, 2147483648
        %v623 = vxor.u32 %v607, 2147483648
        %v624 = vxor.u32 %v608, 2147483648
        %v625 = vxor.u32 %v609, 2147483648
        %v626 = vxor.u32 %v610, 2147483648
        %v627 = vxor.u32 %v611, 2147483648
        %v628 = vmul.f32 %v612, 1.442695
        %v629 = vpow.pop %v628
        %v630 = vmul.f32 %v613, 1.442695
        %v631 = vpow.pop %v630
        %v632 = vmul.f32 %v614, 1.442695
        %v633 = vpow.pop %v632
        %v634 = vmul.f32 %v615, 1.442695
        %v635 = vpow.pop %v634
        %v636 = vmul.f32 %v616, 1.442695
        %v637 = vpow.pop %v636
        %v638 = vmul.f32 %v617, 1.442695
        %v639 = vpow.pop %v638
        %v640 = vmul.f32 %v618, 1.442695
        %v641 = vpow.pop %v640
        %v642 = vmul.f32 %v619, 1.442695
        %v643 = vpow.pop %v642
        %v644 = vmul.f32 %v620, 1.442695
        %v645 = vpow.pop %v644
        %v646 = vmul.f32 %v621, 1.442695
        %v647 = vpow.pop %v646
        %v648 = vmul.f32 %v622, 1.442695
        %v649 = vpow.pop %v648
        %v650 = vmul.f32 %v623, 1.442695
        %v651 = vpow.pop %v650
        %v652 = vmul.f32 %v624, 1.442695
        %v653 = vpow.pop %v652
        %v654 = vmul.f32 %v625, 1.442695
        %v655 = vpow.pop %v654
        %v656 = vmul.f32 %v626, 1.442695
        %v657 = vpow.pop %v656
        %v658 = vmul.f32 %v627, 1.442695
        %v659 = vpow.pop %v658
        %v660 = vadd.f32 %v629, 1.0
        %v661 = vadd.f32 %v631, 1.0
        %v662 = vadd.f32 %v633, 1.0
        %v663 = vadd.f32 %v635, 1.0
        %v664 = vadd.f32 %v637, 1.0
        %v665 = vadd.f32 %v639, 1.0
        %v666 = vadd.f32 %v641, 1.0
        %v667 = vadd.f32 %v643, 1.0
        %v668 = vadd.f32 %v645, 1.0
        %v669 = vadd.f32 %v647, 1.0
        %v670 = vadd.f32 %v649, 1.0
        %v671 = vadd.f32 %v651, 1.0
        %v672 = vadd.f32 %v653, 1.0
        %v673 = vadd.f32 %v655, 1.0
        %v674 = vadd.f32 %v657, 1.0
        %v675 = vadd.f32 %v659, 1.0
        %v676 = vrcp.pop %v660
        %v677 = vmul.f32 1.0, %v676
        %v678 = vrcp.pop %v661
        %v679 = vmul.f32 1.0, %v678
        %v680 = vrcp.pop %v662
        %v681 = vmul.f32 1.0, %v680
        %v682 = vrcp.pop %v663
        %v683 = vmul.f32 1.0, %v682
        %v684 = vrcp.pop %v664
        %v685 = vmul.f32 1.0, %v684
        %v686 = vrcp.pop %v665
        %v687 = vmul.f32 1.0, %v686
        %v688 = vrcp.pop %v666
        %v689 = vmul.f32 1.0, %v688
        %v690 = vrcp.pop %v667
        %v691 = vmul.f32 1.0, %v690
        %v692 = vrcp.pop %v668
        %v693 = vmul.f32 1.0, %v692
        %v694 = vrcp.pop %v669
        %v695 = vmul.f32 1.0, %v694
        %v696 = vrcp.pop %v670
        %v697 = vmul.f32 1.0, %v696
        %v698 = vrcp.pop %v671
        %v699 = vmul.f32 1.0, %v698
        %v700 = vrcp.pop %v672
        %v701 = vmul.f32 1.0, %v700
        %v702 = vrcp.pop %v673
        %v703 = vmul.f32 1.0, %v702
        %v704 = vrcp.pop %v674
        %v705 = vmul.f32 1.0, %v704
        %v706 = vrcp.pop %v675
        %v707 = vmul.f32 1.0, %v706
        %v708 = vmul.f32 %v486, %v677
        %v709 = vmul.f32 %v488, %v679
        %v710 = vmul.f32 %v492, %v681
        %v711 = vmul.f32 %v494, %v683
        %v712 = vmul.f32 %v498, %v685
        %v713 = vmul.f32 %v500, %v687
        %v714 = vmul.f32 %v504, %v689
        %v715 = vmul.f32 %v506, %v691
        %v716 = vmul.f32 %v510, %v693
        %v717 = vmul.f32 %v512, %v695
        %v718 = vmul.f32 %v516, %v697
        %v719 = vmul.f32 %v518, %v699
        %v720 = vmul.f32 %v522, %v701
        %v721 = vmul.f32 %v524, %v703
        %v722 = vmul.f32 %v528, %v705
        %v723 = vmul.f32 %v530, %v707
        %v724 = vld [vmem:[#allocation2] sm:$0xff]
        %v725 = vld [vmem:[#allocation2 + $0x8] sm:$0xff]
        %v726 = vld [vmem:[#allocation2 + $0x10] sm:$0xff]
        %v727 = vld [vmem:[#allocation2 + $0x18] sm:$0xff]
        %v728 = vld [vmem:[#allocation2 + $0x20] sm:$0xff]
        %v729 = vld [vmem:[#allocation2 + $0x28] sm:$0xff]
        %v730 = vld [vmem:[#allocation2 + $0x30] sm:$0xff]
        %v731 = vld [vmem:[#allocation2 + $0x38] sm:$0xff]
        %v732 = vld [vmem:[%s305] sm:$0xff]
        %v733 = vld [vmem:[%s305 + $0x8] sm:$0xff]
        %v734 = vld [vmem:[%s305 + $0x10] sm:$0xff]
        %v735 = vld [vmem:[%s305 + $0x18] sm:$0xff]
        %v736 = vld [vmem:[%s305 + $0x20] sm:$0xff]
        %v737 = vld [vmem:[%s305 + $0x28] sm:$0xff]
        %v738 = vld [vmem:[%s305 + $0x30] sm:$0xff]
        %v739 = vld [vmem:[%s305 + $0x38] sm:$0xff]
        %v740 = vld [vmem:[%s305 + $0x40] sm:$0xff]
        %v741 = vld [vmem:[%s305 + $0x48] sm:$0xff]
        %v742 = vld [vmem:[%s305 + $0x50] sm:$0xff]
        %v743 = vld [vmem:[%s305 + $0x58] sm:$0xff]
        %v744 = vld [vmem:[%s305 + $0x60] sm:$0xff]
        %v745 = vld [vmem:[%s305 + $0x68] sm:$0xff]
        %v746 = vld [vmem:[%s305 + $0x70] sm:$0xff]
        %v747 = vld [vmem:[%s305 + $0x78] sm:$0xff]
        %v748 = vld [vmem:[%s305 + $0x80] sm:$0xff]
        %v749 = vld [vmem:[%s305 + $0x88] sm:$0xff]
        %v750 = vld [vmem:[%s305 + $0x90] sm:$0xff]
        %v751 = vld [vmem:[%s305 + $0x98] sm:$0xff]
        %v752 = vld [vmem:[%s305 + $0xa0] sm:$0xff]
        %v753 = vld [vmem:[%s305 + $0xa8] sm:$0xff]
        %v754 = vld [vmem:[%s305 + $0xb0] sm:$0xff]
        %v755 = vld [vmem:[%s305 + $0xb8] sm:$0xff]
        %v756 = vld [vmem:[%s305 + $0xc0] sm:$0xff]
        %v757 = vld [vmem:[%s305 + $0xc8] sm:$0xff]
        %v758 = vld [vmem:[%s305 + $0xd0] sm:$0xff]
        %v759 = vld [vmem:[%s305 + $0xd8] sm:$0xff]
        %v760 = vld [vmem:[%s305 + $0xe0] sm:$0xff]
        %v761 = vld [vmem:[%s305 + $0xe8] sm:$0xff]
        %v762 = vld [vmem:[%s305 + $0xf0] sm:$0xff]
        %v763 = vld [vmem:[%s305 + $0xf8] sm:$0xff]
        %764 = vmatprep.subr.mxu0 0.0
        %765 = vmatpush1.msra.mxu0 %v732
        %766 = vmatprep.subr.mxu0 0.0
        %767 = vmatpush1.msra.mxu0 %v733
        %768 = vmatprep.subr.mxu0 0.0
        %769 = vmatpush1.msra.mxu0 %v734
        %770 = vmatprep.subr.mxu0 0.0
        %771 = vmatpush1.msra.mxu0 %v735
        %772 = vmatprep.subr.mxu0 0.0
        %773 = vmatpush1.msra.mxu0 %v736
        %774 = vmatprep.subr.mxu0 0.0
        %775 = vmatpush1.msra.mxu0 %v737
        %776 = vmatprep.subr.mxu0 0.0
        %777 = vmatpush1.msra.mxu0 %v738
        %778 = vmatprep.subr.mxu0 0.0
        %779 = vmatpush1.msra.mxu0 %v739
        %780 = vmatprep.subr.mxu0 0.0
        %781 = vmatpush1.msra.mxu0 %v740
        %782 = vmatprep.subr.mxu0 0.0
        %783 = vmatpush1.msra.mxu0 %v741
        %784 = vmatprep.subr.mxu0 0.0
        %785 = vmatpush1.msra.mxu0 %v742
        %786 = vmatprep.subr.mxu0 0.0
        %787 = vmatpush1.msra.mxu0 %v743
        %788 = vmatprep.subr.mxu0 0.0
        %789 = vmatpush1.msra.mxu0 %v744
        %790 = vmatprep.subr.mxu0 0.0
        %791 = vmatpush1.msra.mxu0 %v745
        %792 = vmatprep.subr.mxu0 0.0
        %793 = vmatpush1.msra.mxu0 %v746
        %794 = vmatprep.subr.mxu0 0.0
        %795 = vmatpush1.msra.mxu0 %v747
        %796 = vmatprep.subr.mxu0 0.0
        %797 = vmatpush1.msra.mxu0 %v748
        %798 = vmatprep.subr.mxu0 0.0
        %799 = vmatpush1.msra.mxu0 %v749
        %800 = vmatprep.subr.mxu0 0.0
        %801 = vmatpush1.msra.mxu0 %v750
        %802 = vmatprep.subr.mxu0 0.0
        %803 = vmatpush1.msra.mxu0 %v751
        %804 = vmatprep.subr.mxu0 0.0
        %805 = vmatpush1.msra.mxu0 %v752
        %806 = vmatprep.subr.mxu0 0.0
        %807 = vmatpush1.msra.mxu0 %v753
        %808 = vmatprep.subr.mxu0 0.0
        %809 = vmatpush1.msra.mxu0 %v754
        %810 = vmatprep.subr.mxu0 0.0
        %811 = vmatpush1.msra.mxu0 %v755
        %812 = vmatprep.subr.mxu0 0.0
        %813 = vmatpush1.msra.mxu0 %v756
        %814 = vmatprep.subr.mxu0 0.0
        %815 = vmatpush1.msra.mxu0 %v757
        %816 = vmatprep.subr.mxu0 0.0
        %817 = vmatpush1.msra.mxu0 %v758
        %818 = vmatprep.subr.mxu0 0.0
        %819 = vmatpush1.msra.mxu0 %v759
        %820 = vmatprep.subr.mxu0 0.0
        %821 = vmatpush1.msra.mxu0 %v760
        %822 = vmatprep.subr.mxu0 0.0
        %823 = vmatpush1.msra.mxu0 %v761
        %824 = vmatprep.subr.mxu0 0.0
        %825 = vmatpush1.msra.mxu0 %v762
        %826 = vmatprep.subr.mxu0 0.0
        %827 = vmatpush1.msra.mxu0 %v763
        %828 = vmatprep.mubr.f32.mxu0 %v709
        %829 = vmatmul.mubr.f32.gmra.mrb[0].mxu0 %v708
        %v830 = vpop.f32.mrb[0].mxu0
        %v831 = vadd.f32 0.0, %v830
        %v832 = vpop.f32.mrb[0].mxu0
        %833 = vmatprep.mubr.f32.mxu0 %v711
        %834 = vmatmul.mubr.f32.gmra.mrb[0].mxu0 %v710
        %v835 = vpop.f32.mrb[0].mxu0
        %v836 = vadd.f32 0.0, %v835
        %v837 = vpop.f32.mrb[0].mxu0
        %838 = vmatprep.mubr.f32.mxu0 %v713
        %839 = vmatmul.mubr.f32.gmra.mrb[0].mxu0 %v712
        %v840 = vpop.f32.mrb[0].mxu0
        %v841 = vadd.f32 0.0, %v840
        %v842 = vpop.f32.mrb[0].mxu0
        %843 = vmatprep.mubr.f32.mxu0 %v715
        %844 = vmatmul.mubr.f32.gmra.mrb[0].mxu0 %v714
        %v845 = vpop.f32.mrb[0].mxu0
        %v846 = vadd.f32 0.0, %v845
        %v847 = vpop.f32.mrb[0].mxu0
        %848 = vmatprep.mubr.f32.mxu0 %v717
        %849 = vmatmul.mubr.f32.gmra.mrb[0].mxu0 %v716
        %v850 = vpop.f32.mrb[0].mxu0
        %v851 = vadd.f32 0.0, %v850
        %v852 = vpop.f32.mrb[0].mxu0
        %853 = vmatprep.mubr.f32.mxu0 %v719
        %854 = vmatmul.mubr.f32.gmra.mrb[0].mxu0 %v718
        %v855 = vpop.f32.mrb[0].mxu0
        %v856 = vadd.f32 0.0, %v855
        %v857 = vpop.f32.mrb[0].mxu0
        %858 = vmatprep.mubr.f32.mxu0 %v721
        %859 = vmatmul.mubr.f32.gmra.mrb[0].mxu0 %v720
        %v860 = vpop.f32.mrb[0].mxu0
        %v861 = vadd.f32 0.0, %v860
        %v862 = vpop.f32.mrb[0].mxu0
        %863 = vmatprep.mubr.f32.mxu0 %v723
        %864 = vmatmul.mubr.f32.gmra.mrb[0].mxu0 %v722
        %v865 = vpop.f32.mrb[0].mxu0
        %v866 = vadd.f32 0.0, %v865
        %v867 = vpop.f32.mrb[0].mxu0
        %868 = vdwg.mxu0
        %v869 = vadd.f32 %v724, %v831
        %v870 = vadd.f32 %v725, %v836
        %v871 = vadd.f32 %v726, %v841
        %v872 = vadd.f32 %v727, %v846
        %v873 = vadd.f32 %v728, %v851
        %v874 = vadd.f32 %v729, %v856
        %v875 = vadd.f32 %v730, %v861
        %v876 = vadd.f32 %v731, %v866
        %877 = vst [vmem:[#allocation2] sm:$0xff] %v869
        %878 = vst [vmem:[#allocation2 + $0x8] sm:$0xff] %v870
        %879 = vst [vmem:[#allocation2 + $0x10] sm:$0xff] %v871
        %880 = vst [vmem:[#allocation2 + $0x18] sm:$0xff] %v872
        %881 = vst [vmem:[#allocation2 + $0x20] sm:$0xff] %v873
        %882 = vst [vmem:[#allocation2 + $0x28] sm:$0xff] %v874
        %883 = vst [vmem:[#allocation2 + $0x30] sm:$0xff] %v875
        %884 = vst [vmem:[#allocation2 + $0x38] sm:$0xff] %v876
        %p885 = scmp.eq.s32.totalorder %s30, 1
        // Predicated region
        $region57: #{tpu_custom_call.1} parent=39 // pred_check
          %p886 = pneg %p885
        $region58: #{tpu_custom_call.1} parent=39 // pred_check_branch
          %888 = sbr.rel (%p886) target = $region60
        $region59: #{tpu_custom_call.1} parent=39 // pred_region
          %v889 = vld [vmem:[#allocation2] sm:$0xff]
          %v890 = vld [vmem:[#allocation2 + $0x8] sm:$0xff]
          %v891 = vld [vmem:[#allocation2 + $0x10] sm:$0xff]
          %v892 = vld [vmem:[#allocation2 + $0x18] sm:$0xff]
          %v893 = vld [vmem:[#allocation2 + $0x20] sm:$0xff]
          %v894 = vld [vmem:[#allocation2 + $0x28] sm:$0xff]
          %v895 = vld [vmem:[#allocation2 + $0x30] sm:$0xff]
          %v896 = vld [vmem:[#allocation2 + $0x38] sm:$0xff]
          %v897 = vld [vmem:[%s4] sm:$0x1]
          %v899 = vlaneseq
          %v900 = vshrl.u32 %v899, 7
          %v901 = vsub.s32 0, %v900
          %v902 = vrot.slane %v897, %v901
          %v904 = vadd.f32 %v889, %v902
          %v905 = vadd.f32 %v890, %v902
          %v906 = vadd.f32 %v891, %v902
          %v907 = vadd.f32 %v892, %v902
          %v908 = vadd.f32 %v893, %v902
          %v909 = vadd.f32 %v894, %v902
          %v910 = vadd.f32 %v895, %v902
          %v911 = vadd.f32 %v896, %v902
          %912 = vst [vmem:[%s345] sm:$0xff] %v904
          %913 = vst [vmem:[%s345 + $0x8] sm:$0xff] %v905
          %914 = vst [vmem:[%s345 + $0x10] sm:$0xff] %v906
          %915 = vst [vmem:[%s345 + $0x18] sm:$0xff] %v907
          %916 = vst [vmem:[%s345 + $0x20] sm:$0xff] %v908
          %917 = vst [vmem:[%s345 + $0x28] sm:$0xff] %v909
          %918 = vst [vmem:[%s345 + $0x30] sm:$0xff] %v910
          %919 = vst [vmem:[%s345 + $0x38] sm:$0xff] %v911
        $region60: #{tpu_custom_call.1} parent=39 // pred_fallthru
          _
        %s920 = sand.u32 %s170, 1
        %s921 = scalar_lea.sflag [#allocation5], %s920
        %s922 = sand.u32 %s170, 1
        %s923 = smul.addr %s922, 64
        %s924 = scalar_lea.vmem [#allocation9], %s923
        // Predicated region
        $region61: #{tpu_custom_call.1} parent=39 // pred_check
          %p925 = pneg %p180
        $region62: #{tpu_custom_call.1} parent=39 // pred_check_branch
          %927 = sbr.rel (%p925) target = $region64
        $region63: #{tpu_custom_call.1} parent=39 // pred_region
          %s928 = smul.u32 8, %s29
          %s930 = ssub.s32 1024, 1024
          %931 = vsyncadd %s921, %s930
          %s932 = smul.addr %s928, 128
          %s933 = scalar_lea.hbm %s5, %s932
          %s934 = sshll.u32 %s924, 4
          %s935 = int_to_ptr.vmem [resolvable:$true] %s934
          %940 = dma.vmem_to_hbm [thread:$0]  %s935, 1024, %s933, %s921, 128, 128, 8
        $region64: #{tpu_custom_call.1} parent=39 // pred_fallthru
          _
      $region40: #{tpu_custom_call.1} parent=5 // pred_fallthru
        _
      %p941 = scmp.le.s32.totalorder 2, %s20
      // Predicated region
      $region65: #{tpu_custom_call.1} parent=5 // pred_check
        %p942 = pneg %p941
      $region66: #{tpu_custom_call.1} parent=5 // pred_check_branch
        %944 = sbr.rel (%p942) target = $region68
      $region67: #{tpu_custom_call.1} parent=5 // pred_region
        %s945 = ssub.s32 %s20, 2
        // Predicated region
        $region69: #{tpu_custom_call.1} parent=67 // pred_check
          %p946 = pneg %p186
        $region70: #{tpu_custom_call.1} parent=67 // pred_check_branch
          %948 = sbr.rel (%p946) target = $region72
        $region71: #{tpu_custom_call.1} parent=67 // pred_region
          %s949 = sand.u32 %s171, 1
          %s950 = scalar_lea.sflag [#allocation5], %s949
          %s951 = sand.u32 %s171, 1
          %s952 = smul.addr %s951, 64
          %s953 = scalar_lea.vmem [#allocation9], %s952
          %954 = dma.done %s950, 1024
        $region72: #{tpu_custom_call.1} parent=67 // pred_fallthru
          _
      $region68: #{tpu_custom_call.1} parent=5 // pred_fallthru
        _
    $region6: #{tpu_custom_call.1} parent=1 // loop_footer
      %s24 = sadd.s32 1, %s20
    $region7: #{tpu_custom_call.1} parent=1 // loop_footer_branch
      %19 = sbr.rel target = $region3
    $region8: #{tpu_custom_call.1} parent=1 // loop_exit
      _
    %955 = vsyncpa [#allocation4], 1
    %s956 = scalar_lea.sflag [#allocation4], 1
    %957 = vsyncpa %s956, 1
    %958 = vsyncpa [#allocation7], 1
    %s959 = scalar_lea.sflag [#allocation7], 1
    %960 = vsyncpa %s959, 1
    %961 = vsyncpa [#allocation5], 1
    %s962 = scalar_lea.sflag [#allocation5], 1
    %963 = vsyncpa %s962, 1

</llo_original>
